<compile_context>
chip_gen: v5e
topology: v5e:2x2
jax: 0.10.0
libtpu: 0.0.40
codegen_flags: <defaults>
</compile_context>

<pallas_src>
import jax
import jax.numpy as jnp
from jax.experimental import pallas as pl
from jax.experimental.pallas import tpu as pltpu


def _row_gather_kernel(idx_smem_ref, w_row_ref, o_row_ref):
    # The gather itself happens in the BlockSpec index_map (idx_ref[i] picks
    # which weight row is DMA'd in); the body only forwards that row.
    del idx_smem_ref  # indices are consumed by the index_maps, not the body
    o_row_ref[...] = w_row_ref[...]


def trajectory_forward(x, weights):
    """JAX/Pallas equivalent of Trjectory.forward.

    x:       (B, C) float32, C >= 3
    weights: (n_actions, action_space) float32
    returns (mean (T, action_space) float32, sigma (1,) float32),
    with T = B * (C - 2).
    """
    n_actions, action_space = weights.shape

    # Glue: t = x[:, 2:].long().flatten().  Indices are assumed in-range,
    # exactly as the PyTorch module assumes (weights[t] would raise on OOB).
    t = x[:, 2:].astype(jnp.int32).reshape(-1)            # (T,) int32
    T = t.shape[0]

    # Present weights / output as (rows, 1, action_space): each (1, 1, A)
    # block's last two dims equal the full array dims.
    w3 = weights.reshape(n_actions, 1, action_space)

    grid_spec = pltpu.PrefetchScalarGridSpec(
        num_scalar_prefetch=1,            # t -> SMEM, visible to index_maps
        grid=(T,),
        in_specs=[
            # DMA-gather: grid step i pulls weight row t[i] straight from HBM.
            pl.BlockSpec((1, 1, action_space),
                         lambda i, idx_ref: (idx_ref[i], 0, 0)),
        ],
        out_specs=pl.BlockSpec((1, 1, action_space),
                               lambda i, idx_ref: (i, 0, 0)),
    )

    mean3 = pl.pallas_call(
        _row_gather_kernel,
        out_shape=jax.ShapeDtypeStruct((T, 1, action_space), jnp.float32),
        grid_spec=grid_spec,
        compiler_params=pltpu.CompilerParams(
            dimension_semantics=("parallel",)),   # shard rows across TCs (v7x)
    )(t, w3)

    mean = mean3.reshape(T, action_space)
    sigma = jnp.array([1.0], dtype=jnp.float32)
    return mean, sigma


if __name__ == "__main__":
    n_actions = 30
    action_space = 2
    start_values = 0.5

    # Module-faithful parameter init (ones * start_values) plus a second,
    # distinct-valued table so the gather is actually validated.
    weights_init = jnp.ones((n_actions, action_space), jnp.float32) * start_values
    weights_dist = jnp.arange(n_actions * action_space,
                              dtype=jnp.float32).reshape(n_actions, action_space)

    key = jax.random.PRNGKey(0)

    def make_x(k, B, C):
        k1, k2 = jax.random.split(k)
        head = jax.random.normal(k1, (B, 2), dtype=jnp.float32)
        idx_cols = jax.random.randint(k2, (B, C - 2), 0,
                                      n_actions).astype(jnp.float32)
        return jnp.concatenate([head, idx_cols], axis=1)   # (B, C) float32

    k_a, k_b = jax.random.split(key)
    cases = [(k_a, 2, 4), (k_b, 4, 8)]   # T = 4 and T = 24

    for kk, B, C in cases:
        x = make_x(kk, B, C)
        for w in (weights_init, weights_dist):
            mean, sigma = trajectory_forward(x, w)
            mean = jax.block_until_ready(mean)
            sigma = jax.block_until_ready(sigma)

            # Reference: plain JAX gather (same as PyTorch weights[t, :]).
            t_ref = x[:, 2:].astype(jnp.int32).reshape(-1)
            mean_ref = w[t_ref, :]

            assert mean.shape == (B * (C - 2), action_space)
            assert sigma.shape == (1,)
            assert jnp.allclose(mean, mean_ref), "mean mismatch vs reference gather"
            assert jnp.allclose(sigma, jnp.array([1.0], jnp.float32))

    print("KERNEL_OK")
</pallas_src>

<mosaic_0001>
module attributes {stable_mosaic.version = 11 : i64} {
  func.func @_row_gather_kernel(%arg0: i32, %arg1: memref<4xi32, #tpu.memory_space<smem>>, %arg2: memref<1x1x2xf32, #tpu.memory_space<vmem>>, %arg3: memref<1x1x2xf32, #tpu.memory_space<vmem>>) attributes {dimension_semantics = [#tpu.dimension_semantics<parallel>], iteration_bounds = array<i64: 4>, scalar_prefetch = 1 : i64, scratch_operands = 0 : i64, tpu.core_type = #tpu.core_type<tc>, window_params = [{transform_indices = @transform_0, window_bounds = array<i64: 1, 1, 2>}, {transform_indices = @transform_1, window_bounds = array<i64: 1, 1, 2>}]} {
    %c0 = arith.constant 0 : index
    %c0_0 = arith.constant 0 : index
    %c0_1 = arith.constant 0 : index
    %0 = vector.load %arg2[%c0, %c0_0, %c0_1] : memref<1x1x2xf32, #tpu.memory_space<vmem>>, vector<1x1x2xf32>
    %c0_2 = arith.constant 0 : index
    %c0_3 = arith.constant 0 : index
    %c0_4 = arith.constant 0 : index
    %1 = vector.load %arg3[%c0_2, %c0_3, %c0_4] : memref<1x1x2xf32, #tpu.memory_space<vmem>>, vector<1x1x2xf32>
    tpu.vector_store %arg3[%c0_2, %c0_3, %c0_4], %0 {strides = array<i32>} : memref<1x1x2xf32, #tpu.memory_space<vmem>>, vector<1x1x2xf32>,
    return
  }
  func.func @transform_0(%arg0: i32, %arg1: memref<4xi32, #tpu.memory_space<smem>>) -> (i32, i32, i32) {
    %0 = arith.index_cast %arg0 : i32 to index
    %1 = memref.load %arg1[%0] : memref<4xi32, #tpu.memory_space<smem>>
    %c0_i32 = arith.constant 0 : i32
    %c0_i32_0 = arith.constant 0 : i32
    %c0_i32_1 = arith.constant 0 : i32
    return %1, %c0_i32, %c0_i32_0 : i32, i32, i32
  }
  func.func @transform_1(%arg0: i32, %arg1: memref<4xi32, #tpu.memory_space<smem>>) -> (i32, i32, i32) {
    %c0_i32 = arith.constant 0 : i32
    %c0_i32_0 = arith.constant 0 : i32
    %c0_i32_1 = arith.constant 0 : i32
    return %arg0, %c0_i32, %c0_i32_0 : i32, i32, i32
  }
}

</mosaic_0001>

<llo_original>
// kernel: tpu_custom_call.1
$region0: #{tpu_custom_call.1}
  #allocation0 [shape = 'u32[]', space=smem, size = 0x4, offset = 0x4, fixed_abs, tag = 'smem constant byte address 0x4 - core index']
  #allocation1 [shape = 'u32[72,128]{1,0:T(1,128)}', space=vmem, size = 0x9000, scoped, tag = 'internal scratch']
  #allocation2 [shape = 's32[1]{0}', space=sflag, size = 0x4, scoped, tag = 'scoped memory for tpu_custom_call.1']
  #allocation3 [shape = 'u8[512]{0}', space=smem, size = 0x200, scoped, tag = 'prefetched SMEM operand 0']
  %s0 = inlined_call_operand.vmem [shape: s32[4], index: 0, kind: input, shape index: {}]
  %s1 = inlined_call_operand.vmem [shape: f32[30,1,2], index: 1, kind: input, shape index: {}]
  %s2 = inlined_call_operand.vmem [shape: f32[4,1,2], index: 2, kind: output, shape index: {}]
  %s3 = sld [smem:[#allocation0]]
  $region37: #{tpu_custom_call.1} parent=0
    _
  %s5 = ssub.s32 1, %s3
  %s6 = scalar_select 0, %s5, %s3
  %s8 = sshll.u32 %s0, 4
  %s9 = int_to_ptr.vmem [resolvable:$true] %s8
  %11 = dma.vmem_to_smem %s9, 16, [#allocation3], [#allocation2]
  %13 = dma.done [#allocation2], 16
  %14 = sfence
  loop: start=0, step=1, limit=6
  $region2: #{tpu_custom_call.1} parent=0 // loop_pre_header
    _
  $region3: #{tpu_custom_call.1} parent=0 // loop_header
    %s16 = sphi 0, %s20
    %p17 = scmp.ge.s32.totalorder %s16, 6
    %s28 = sphi 0, %s30
    %s31 = sphi 0, %s28
    %s32 = sphi 0, %s31
    %s48 = sphi 0, %s32
    %s54 = sphi 0, %s56
    %s57 = sphi 0, %s54
    %s58 = sphi 0, %s57
    %s74 = sphi 0, %s58
  $region4: #{tpu_custom_call.1} parent=0 // loop_header_branch
    %19 = sbr.rel (%p17) target = $region8
  $region5: #{tpu_custom_call.1} parent=0 // loop_body
    %s21 = ssub.s32 %s16, 1
    %s22 = ssub.s32 %s16, 2
    %s23 = sadd.s32 %s16, 1
    %s24 = sld [smem:[#allocation3 + %s16]]
    %s25 = sld [smem:[#allocation3 + %s23]]
    %s26 = ssub.s32 %s24, %s25
    %p27 = scmp.eq.s32.totalorder %s26, 0
    %s29 = sadd.s32 %s28, 1
    %s30 = scalar_select %p27, %s28, %s29
    %p33 = pneg %p27
    %p34 = scmp.eq.s32.totalorder %s16, 3
    %p35 = por %p33, %p34
    %p36 = scmp.ne.s32.totalorder %s28, %s31
    %p37 = scmp.eq.s32.totalorder %s16, 0
    %p38 = por %p36, %p37
    %p39 = scmp.ne.s32.totalorder %s28, %s31
    %p40 = scmp.eq.s32.totalorder %s21, 3
    %p41 = por %p39, %p40
    %p42 = scmp.ne.s32.totalorder %s31, %s32
    %p43 = scmp.eq.s32.totalorder %s21, 0
    %p44 = por %p42, %p43
    %p45 = scmp.ne.s32.totalorder %s31, %s32
    %p46 = scmp.eq.s32.totalorder %s22, 3
    %p47 = por %p45, %p46
    %p49 = scmp.ne.s32.totalorder %s32, %s48
    %p50 = scmp.eq.s32.totalorder %s22, 0
    %p51 = por %p49, %p50
    %s52 = ssub.s32 %s16, %s23
    %p53 = scmp.eq.s32.totalorder %s52, 0
    %s55 = sadd.s32 %s54, 1
    %s56 = scalar_select %p53, %s54, %s55
    %p59 = pneg %p53
    %p60 = scmp.eq.s32.totalorder %s16, 3
    %p61 = por %p59, %p60
    %p62 = scmp.ne.s32.totalorder %s54, %s57
    %p63 = scmp.eq.s32.totalorder %s16, 0
    %p64 = por %p62, %p63
    %p65 = scmp.ne.s32.totalorder %s54, %s57
    %p66 = scmp.eq.s32.totalorder %s21, 3
    %p67 = por %p65, %p66
    %p68 = scmp.ne.s32.totalorder %s57, %s58
    %p69 = scmp.eq.s32.totalorder %s21, 0
    %p70 = por %p68, %p69
    %p71 = scmp.ne.s32.totalorder %s57, %s58
    %p72 = scmp.eq.s32.totalorder %s22, 3
    %p73 = por %p71, %p72
    %p75 = scmp.ne.s32.totalorder %s58, %s74
    %p76 = scmp.eq.s32.totalorder %s22, 0
    %p77 = por %p75, %p76
    %p78 = scmp.le.s32.totalorder 1, %s16
    %p79 = scmp.lt.s32.totalorder %s16, 5
    %p80 = pnand %p78, %p79
    %p81 = pneg %p80
    // Predicated region
    $region9: #{tpu_custom_call.1} parent=5 // pred_check
      _
    $region10: #{tpu_custom_call.1} parent=5 // pred_check_branch
      %83 = sbr.rel (%p80) target = $region12
    $region11: #{tpu_custom_call.1} parent=5 // pred_region
      %s84 = ssub.s32 %s16, 1
    $region12: #{tpu_custom_call.1} parent=5 // pred_fallthru
      _
    %p85 = scmp.lt.s32.totalorder %s16, 4
    // Predicated region
    $region13: #{tpu_custom_call.1} parent=5 // pred_check
      %p86 = pneg %p85
    $region14: #{tpu_custom_call.1} parent=5 // pred_check_branch
      %88 = sbr.rel (%p86) target = $region16
    $region15: #{tpu_custom_call.1} parent=5 // pred_region
      // Predicated region
      $region17: #{tpu_custom_call.1} parent=15 // pred_check
        %p89 = pneg %p38
      $region18: #{tpu_custom_call.1} parent=15 // pred_check_branch
        %91 = sbr.rel (%p89) target = $region20
      $region19: #{tpu_custom_call.1} parent=15 // pred_region
        %s92 = sld [smem:[#allocation3 + %s16]]
        %p93 = scmp.lt.s32.totalorder %s92, 29
        %s94 = scalar_select %p93, %s92, 29
        %s95 = scalar_lea.vmem %s1, %s94
        %s96 = sld [smem:[#allocation3 + %s16]]
      $region20: #{tpu_custom_call.1} parent=15 // pred_fallthru
        _
    $region16: #{tpu_custom_call.1} parent=5 // pred_fallthru
      _
    %p97 = scmp.le.s32.totalorder 1, %s16
    %p98 = scmp.lt.s32.totalorder %s16, 5
    %p99 = pnand %p97, %p98
    %p100 = pneg %p99
    // Predicated region
    $region21: #{tpu_custom_call.1} parent=5 // pred_check
      _
    $region22: #{tpu_custom_call.1} parent=5 // pred_check_branch
      %102 = sbr.rel (%p99) target = $region24
    $region23: #{tpu_custom_call.1} parent=5 // pred_region
      %s103 = ssub.s32 %s16, 1
      %s104 = sld [smem:[#allocation3 + %s21]]
      %p105 = scmp.lt.s32.totalorder %s104, 29
      %s106 = scalar_select %p105, %s104, 29
      %s107 = scalar_lea.vmem %s1, %s106
      %p108 = pneg %p44
      %p109 = pneg %p41
      %p110 = pneg %p70
      %p111 = pneg %p67
      %p112 = scmp.lt.s32.totalorder %s21, 3
      %s113 = scalar_select %p112, %s21, 3
      %s114 = scalar_lea.vmem %s2, %s113
      %s115 = sld [smem:[#allocation3 + %s21]]
      %p116 = scmp.lt.s32.totalorder %s115, 29
      %s117 = scalar_select %p116, %s115, 29
      %s118 = scalar_lea.vmem %s1, %s117
      %s119 = sld [smem:[#allocation3 + %s21]]
      %p120 = scmp.lt.s32.totalorder %s21, 3
      %s121 = scalar_select %p120, %s21, 3
      %s122 = scalar_lea.vmem %s2, %s121
      %v123 = vld [vmem:[%s118] sm:$0x1]
      %vm124 = vcmask 8192
      %125 = vst.msk [vmem:[%s122] sm:$0x1] %vm124, %v123
      %p126 = scmp.lt.s32.totalorder %s21, 3
      %s127 = scalar_select %p126, %s21, 3
      %s128 = scalar_lea.vmem %s2, %s127
      // Predicated region
      $region25: #{tpu_custom_call.1} parent=23 // pred_check
        %p129 = pneg %p67
      $region26: #{tpu_custom_call.1} parent=23 // pred_check_branch
        %131 = sbr.rel (%p129) target = $region28
      $region27: #{tpu_custom_call.1} parent=23 // pred_region
        _
      $region28: #{tpu_custom_call.1} parent=23 // pred_fallthru
        _
    $region24: #{tpu_custom_call.1} parent=5 // pred_fallthru
      _
    %p132 = scmp.le.s32.totalorder 2, %s16
    // Predicated region
    $region29: #{tpu_custom_call.1} parent=5 // pred_check
      %p133 = pneg %p132
    $region30: #{tpu_custom_call.1} parent=5 // pred_check_branch
      %135 = sbr.rel (%p133) target = $region32
    $region31: #{tpu_custom_call.1} parent=5 // pred_region
      %s136 = ssub.s32 %s16, 2
      // Predicated region
      $region33: #{tpu_custom_call.1} parent=31 // pred_check
        %p137 = pneg %p73
      $region34: #{tpu_custom_call.1} parent=31 // pred_check_branch
        %139 = sbr.rel (%p137) target = $region36
      $region35: #{tpu_custom_call.1} parent=31 // pred_region
        %p140 = scmp.lt.s32.totalorder %s22, 3
        %s141 = scalar_select %p140, %s22, 3
        %s142 = scalar_lea.vmem %s2, %s141
      $region36: #{tpu_custom_call.1} parent=31 // pred_fallthru
        _
    $region32: #{tpu_custom_call.1} parent=5 // pred_fallthru
      _
  $region6: #{tpu_custom_call.1} parent=0 // loop_footer
    %s20 = sadd.s32 1, %s16
  $region7: #{tpu_custom_call.1} parent=0 // loop_footer_branch
    %15 = sbr.rel target = $region3
  $region8: #{tpu_custom_call.1} parent=0 // loop_exit
    _

</llo_original>
